<compile_context>
chip_gen: v7x
topology: tpu7x:2x2x1
jax: 0.10.0
libtpu: 0.0.40
codegen_flags: <defaults>
</compile_context>

<pallas_src>
import functools

import jax
import jax.numpy as jnp
from jax.experimental import pallas as pl
from jax.experimental.pallas import tpu as pltpu

_LANE = 128
_SUBLANE = 8


def _round_up(n, m):
    return ((n + m - 1) // m) * m


def _apply_activation(y, name):
    """Elementwise activation in f32 on the VPU/EUP."""
    if name is None:
        return y
    name = name.lower()
    if name == "relu":
        return jnp.maximum(y, 0.0)
    if name == "tanh":
        return jnp.tanh(y)
    if name == "sigmoid":
        return jax.nn.sigmoid(y)
    if name == "leaky_relu":
        # PyTorch nn.LeakyReLU default negative_slope = 0.01
        return jnp.where(y >= 0.0, y, 0.01 * y)
    if name == "elu":
        # PyTorch nn.ELU default alpha = 1.0
        return jnp.where(y >= 0.0, y, jnp.expm1(y))
    raise ValueError(f"Unsupported activation function: {name}")


def _mlp_kernel(num_linear, activation, output_activation, *refs):
    """Fused MLP forward for one (TM, ...) batch tile.

    refs = (x_ref, w0, b0, w1, b1, ..., w_last, b_last, o_ref)
    Weights are bf16 (in_pad, out_pad); biases f32 (1, out_pad); x bf16.
    All matmuls accumulate in f32 on the MXU; activations run in f32.
    """
    x_ref = refs[0]
    o_ref = refs[-1]
    p = refs[1:-1]

    h = x_ref[...]  # bf16 (TM, in_pad)
    for i in range(num_linear):
        w = p[2 * i][...]        # bf16 (in_pad, out_pad)
        b = p[2 * i + 1][...]    # f32  (1, out_pad)
        y = jnp.dot(h, w, preferred_element_type=jnp.float32) + b
        if i < num_linear - 1:
            h = _apply_activation(y, activation).astype(jnp.bfloat16)
        else:
            y = _apply_activation(y, output_activation)
            o_ref[...] = y.astype(o_ref.dtype)


def mlp_forward(x, params, activation="relu", output_activation=None, tm=None):
    """Run the fused MLP Pallas kernel.

    x:      (batch, input_dim) float32 (or bf16)
    params: list of (W, b); W is (in_features, out_features), b is (1, out)
            or (out,).  Last entry is the output layer.
    """
    batch, input_dim = x.shape
    out_dim = params[-1][0].shape[1]
    num_linear = len(params)

    # --- batch tile choice -------------------------------------------------
    if tm is None:
        if batch <= 128:
            tm = _round_up(max(batch, 1), _SUBLANE)
        else:
            # multiple of 256 fills the 256-wide MXU on v6e/v7x
            tm = min(1024, _round_up(batch, 256))
    tm = _round_up(tm, _SUBLANE)
    batch_pad = _round_up(batch, tm)
    grid_m = batch_pad // tm

    in_pad = _round_up(input_dim, _LANE)
    out_pad = _round_up(out_dim, _LANE)

    # --- pad + cast parameters (zero padding is mathematically neutral) ----
    padded = []
    for (w, b) in params:
        fi, fo = w.shape
        fi_p, fo_p = _round_up(fi, _LANE), _round_up(fo, _LANE)
        w_p = jnp.zeros((fi_p, fo_p), jnp.bfloat16).at[:fi, :fo].set(
            w.astype(jnp.bfloat16))
        b_p = jnp.zeros((1, fo_p), jnp.float32).at[:, :fo].set(
            jnp.reshape(b, (1, fo)).astype(jnp.float32))
        padded.append((w_p, b_p))

    x_p = jnp.zeros((batch_pad, in_pad), jnp.bfloat16).at[
        :batch, :input_dim].set(x.astype(jnp.bfloat16))

    # --- specs --------------------------------------------------------------
    flat_args = [x_p]
    in_specs = [pl.BlockSpec((tm, in_pad), lambda i: (i, 0))]
    for (w_p, b_p) in padded:
        flat_args.append(w_p)
        flat_args.append(b_p)
        # block index constant across the grid -> weights stay VMEM-resident
        in_specs.append(pl.BlockSpec(w_p.shape, lambda i: (0, 0)))
        in_specs.append(pl.BlockSpec(b_p.shape, lambda i: (0, 0)))
    out_specs = pl.BlockSpec((tm, out_pad), lambda i: (i, 0))

    # --- cost estimate ------------------------------------------------------
    flops = 0
    transcendentals = 0
    for k, (w_p, _) in enumerate(padded):
        fi_p, fo_p = w_p.shape
        flops += 2 * batch_pad * fi_p * fo_p
        act = activation if k < num_linear - 1 else output_activation
        if act is not None and act.lower() in ("tanh", "sigmoid", "elu"):
            transcendentals += batch_pad * fo_p
    bytes_accessed = (
        x_p.size * 2
        + sum(w_p.size * 2 + b_p.size * 4 for (w_p, b_p) in padded)
        + batch_pad * out_pad * 4
    )

    # --- VMEM budget (resident weights + double-buffered I/O + intermediates)
    w_bytes = sum(w_p.size * 2 + b_p.size * 4 for (w_p, b_p) in padded)
    io_bytes = 2 * (tm * in_pad * 2 + tm * out_pad * 4)
    max_dim = max([in_pad] + [w_p.shape[1] for (w_p, _) in padded])
    inter_bytes = 2 * tm * max_dim * 6  # f32 y + bf16 h, with slack
    need = w_bytes + io_bytes + inter_bytes
    # cap with headroom for v7x's 64 MiB physical VMEM
    vmem_limit = int(min(max(2 * need, 32 * 1024 * 1024), 48 * 1024 * 1024))

    kernel = functools.partial(
        _mlp_kernel, num_linear, activation, output_activation)

    out = pl.pallas_call(
        kernel,
        out_shape=jax.ShapeDtypeStruct((batch_pad, out_pad), jnp.float32),
        grid=(grid_m,),
        in_specs=in_specs,
        out_specs=out_specs,
        compiler_params=pltpu.CompilerParams(
            dimension_semantics=("parallel",),
            vmem_limit_bytes=vmem_limit,
        ),
        cost_estimate=pl.CostEstimate(
            flops=flops,
            transcendentals=transcendentals,
            bytes_accessed=bytes_accessed,
        ),
    )(*flat_args)

    return out[:batch, :out_dim]


def init_mlp_params(key, input_dim, output_dim, hidden_sizes):
    """PyTorch nn.Linear-style init: U(-1/sqrt(fan_in), 1/sqrt(fan_in))."""
    dims = [input_dim] + list(hidden_sizes) + [output_dim]
    params = []
    for i in range(len(dims) - 1):
        fan_in, fan_out = dims[i], dims[i + 1]
        key, kw, kb = jax.random.split(key, 3)
        bound = 1.0 / jnp.sqrt(jnp.float32(fan_in))
        w = jax.random.uniform(
            kw, (fan_in, fan_out), jnp.float32, minval=-bound, maxval=bound)
        b = jax.random.uniform(
            kb, (1, fan_out), jnp.float32, minval=-bound, maxval=bound)
        params.append((w, b))
    return params


def mlp_reference(x, params, activation="relu", output_activation=None):
    """Pure-JAX reference using the same bf16-matmul / f32-accumulate math."""
    h = x.astype(jnp.bfloat16)
    n = len(params)
    y = None
    for k, (w, b) in enumerate(params):
        y = jnp.dot(h, w.astype(jnp.bfloat16),
                    preferred_element_type=jnp.float32)
        y = y + jnp.reshape(b, (1, -1)).astype(jnp.float32)
        act = activation if k < n - 1 else output_activation
        y = _apply_activation(y, act)
        h = y.astype(jnp.bfloat16)
    return y


if __name__ == "__main__":
    # Small shapes consistent with forward(x: (batch, input_dim)).
    batch = 2
    input_dim = 32
    output_dim = 8
    hidden_sizes = [256, 128, 128, 128]  # module default

    key = jax.random.PRNGKey(0)
    key, kx = jax.random.split(key)
    x = jax.random.normal(kx, (batch, input_dim), jnp.float32)

    params = init_mlp_params(key, input_dim, output_dim, hidden_sizes)

    out = mlp_forward(x, params, activation="relu", output_activation=None)
    out = jax.block_until_ready(out)

    ref = mlp_reference(x, params, activation="relu", output_activation=None)
    assert out.shape == (batch, output_dim)
    assert jnp.allclose(out, ref, atol=5e-3, rtol=5e-3), "mismatch vs reference"

    print("KERNEL_OK")
</pallas_src>

<mosaic_0001>
module attributes {stable_mosaic.version = 11 : i64} {
  func.func @_mlp_kernel(%arg0: i32, %arg1: memref<8x128xbf16, #tpu.memory_space<vmem>>, %arg2: memref<128x256xbf16, #tpu.memory_space<vmem>>, %arg3: memref<1x256xf32, #tpu.memory_space<vmem>>, %arg4: memref<256x128xbf16, #tpu.memory_space<vmem>>, %arg5: memref<1x128xf32, #tpu.memory_space<vmem>>, %arg6: memref<128x128xbf16, #tpu.memory_space<vmem>>, %arg7: memref<1x128xf32, #tpu.memory_space<vmem>>, %arg8: memref<128x128xbf16, #tpu.memory_space<vmem>>, %arg9: memref<1x128xf32, #tpu.memory_space<vmem>>, %arg10: memref<128x128xbf16, #tpu.memory_space<vmem>>, %arg11: memref<1x128xf32, #tpu.memory_space<vmem>>, %arg12: memref<8x128xf32, #tpu.memory_space<vmem>>) attributes {dimension_semantics = [#tpu.dimension_semantics<parallel>], iteration_bounds = array<i64: 1>, scalar_prefetch = 0 : i64, scratch_operands = 0 : i64, tpu.core_type = #tpu.core_type<tc>, window_params = [{transform_indices = @transform_0, window_bounds = array<i64: 8, 128>}, {pipeline_mode = #tpu.pipeline_mode<synchronous>, transform_indices = @transform_1, window_bounds = array<i64: 128, 256>}, {pipeline_mode = #tpu.pipeline_mode<synchronous>, transform_indices = @transform_2, window_bounds = array<i64: 1, 256>}, {pipeline_mode = #tpu.pipeline_mode<synchronous>, transform_indices = @transform_3, window_bounds = array<i64: 256, 128>}, {pipeline_mode = #tpu.pipeline_mode<synchronous>, transform_indices = @transform_4, window_bounds = array<i64: 1, 128>}, {pipeline_mode = #tpu.pipeline_mode<synchronous>, transform_indices = @transform_5, window_bounds = array<i64: 128, 128>}, {pipeline_mode = #tpu.pipeline_mode<synchronous>, transform_indices = @transform_6, window_bounds = array<i64: 1, 128>}, {pipeline_mode = #tpu.pipeline_mode<synchronous>, transform_indices = @transform_7, window_bounds = array<i64: 128, 128>}, {pipeline_mode = #tpu.pipeline_mode<synchronous>, transform_indices = @transform_8, window_bounds = array<i64: 1, 128>}, {pipeline_mode = #tpu.pipeline_mode<synchronous>, transform_indices = @transform_9, window_bounds = array<i64: 128, 128>}, {pipeline_mode = #tpu.pipeline_mode<synchronous>, transform_indices = @transform_10, window_bounds = array<i64: 1, 128>}, {transform_indices = @transform_11, window_bounds = array<i64: 8, 128>}]} {
    %c0 = arith.constant 0 : index
    %c0_0 = arith.constant 0 : index
    %0 = vector.load %arg1[%c0, %c0_0] : memref<8x128xbf16, #tpu.memory_space<vmem>>, vector<8x128xbf16>
    %c0_1 = arith.constant 0 : index
    %c0_2 = arith.constant 0 : index
    %1 = vector.load %arg2[%c0_1, %c0_2] : memref<128x256xbf16, #tpu.memory_space<vmem>>, vector<128x256xbf16>
    %c0_3 = arith.constant 0 : index
    %c0_4 = arith.constant 0 : index
    %2 = vector.load %arg3[%c0_3, %c0_4] : memref<1x256xf32, #tpu.memory_space<vmem>>, vector<1x256xf32>
    %cst = arith.constant dense<0.000000e+00> : vector<8x256xf32>
    %3 = tpu.matmul %0, %1, %cst {dimension_numbers = #tpu.dot_dimension_numbers<[1], [0], [0], [1], [0, 0, 1, 1], [], []>} : vector<8x128xbf16>, vector<128x256xbf16>, vector<8x256xf32> -> vector<8x256xf32>
    %4 = vector.broadcast %2 : vector<1x256xf32> to vector<8x256xf32>
    %5 = arith.addf %3, %4 : vector<8x256xf32>
    %cst_5 = arith.constant 0.000000e+00 : f32
    %6 = vector.broadcast %cst_5 : f32 to vector<8x256xf32>
    %7 = arith.maximumf %5, %6 : vector<8x256xf32>
    %8 = arith.truncf %7 : vector<8x256xf32> to vector<8x256xbf16>
    %c0_6 = arith.constant 0 : index
    %c0_7 = arith.constant 0 : index
    %9 = vector.load %arg4[%c0_6, %c0_7] : memref<256x128xbf16, #tpu.memory_space<vmem>>, vector<256x128xbf16>
    %c0_8 = arith.constant 0 : index
    %c0_9 = arith.constant 0 : index
    %10 = vector.load %arg5[%c0_8, %c0_9] : memref<1x128xf32, #tpu.memory_space<vmem>>, vector<1x128xf32>
    %cst_10 = arith.constant dense<0.000000e+00> : vector<8x128xf32>
    %11 = tpu.matmul %8, %9, %cst_10 {dimension_numbers = #tpu.dot_dimension_numbers<[1], [0], [0], [1], [0, 0, 1, 1], [], []>} : vector<8x256xbf16>, vector<256x128xbf16>, vector<8x128xf32> -> vector<8x128xf32>
    %12 = vector.broadcast %10 : vector<1x128xf32> to vector<8x128xf32>
    %13 = arith.addf %11, %12 : vector<8x128xf32>
    %cst_11 = arith.constant 0.000000e+00 : f32
    %14 = vector.broadcast %cst_11 : f32 to vector<8x128xf32>
    %15 = arith.maximumf %13, %14 : vector<8x128xf32>
    %16 = arith.truncf %15 : vector<8x128xf32> to vector<8x128xbf16>
    %c0_12 = arith.constant 0 : index
    %c0_13 = arith.constant 0 : index
    %17 = vector.load %arg6[%c0_12, %c0_13] : memref<128x128xbf16, #tpu.memory_space<vmem>>, vector<128x128xbf16>
    %c0_14 = arith.constant 0 : index
    %c0_15 = arith.constant 0 : index
    %18 = vector.load %arg7[%c0_14, %c0_15] : memref<1x128xf32, #tpu.memory_space<vmem>>, vector<1x128xf32>
    %cst_16 = arith.constant dense<0.000000e+00> : vector<8x128xf32>
    %19 = tpu.matmul %16, %17, %cst_16 {dimension_numbers = #tpu.dot_dimension_numbers<[1], [0], [0], [1], [0, 0, 1, 1], [], []>} : vector<8x128xbf16>, vector<128x128xbf16>, vector<8x128xf32> -> vector<8x128xf32>
    %20 = vector.broadcast %18 : vector<1x128xf32> to vector<8x128xf32>
    %21 = arith.addf %19, %20 : vector<8x128xf32>
    %cst_17 = arith.constant 0.000000e+00 : f32
    %22 = vector.broadcast %cst_17 : f32 to vector<8x128xf32>
    %23 = arith.maximumf %21, %22 : vector<8x128xf32>
    %24 = arith.truncf %23 : vector<8x128xf32> to vector<8x128xbf16>
    %c0_18 = arith.constant 0 : index
    %c0_19 = arith.constant 0 : index
    %25 = vector.load %arg8[%c0_18, %c0_19] : memref<128x128xbf16, #tpu.memory_space<vmem>>, vector<128x128xbf16>
    %c0_20 = arith.constant 0 : index
    %c0_21 = arith.constant 0 : index
    %26 = vector.load %arg9[%c0_20, %c0_21] : memref<1x128xf32, #tpu.memory_space<vmem>>, vector<1x128xf32>
    %cst_22 = arith.constant dense<0.000000e+00> : vector<8x128xf32>
    %27 = tpu.matmul %24, %25, %cst_22 {dimension_numbers = #tpu.dot_dimension_numbers<[1], [0], [0], [1], [0, 0, 1, 1], [], []>} : vector<8x128xbf16>, vector<128x128xbf16>, vector<8x128xf32> -> vector<8x128xf32>
    %28 = vector.broadcast %26 : vector<1x128xf32> to vector<8x128xf32>
    %29 = arith.addf %27, %28 : vector<8x128xf32>
    %cst_23 = arith.constant 0.000000e+00 : f32
    %30 = vector.broadcast %cst_23 : f32 to vector<8x128xf32>
    %31 = arith.maximumf %29, %30 : vector<8x128xf32>
    %32 = arith.truncf %31 : vector<8x128xf32> to vector<8x128xbf16>
    %c0_24 = arith.constant 0 : index
    %c0_25 = arith.constant 0 : index
    %33 = vector.load %arg10[%c0_24, %c0_25] : memref<128x128xbf16, #tpu.memory_space<vmem>>, vector<128x128xbf16>
    %c0_26 = arith.constant 0 : index
    %c0_27 = arith.constant 0 : index
    %34 = vector.load %arg11[%c0_26, %c0_27] : memref<1x128xf32, #tpu.memory_space<vmem>>, vector<1x128xf32>
    %cst_28 = arith.constant dense<0.000000e+00> : vector<8x128xf32>
    %35 = tpu.matmul %32, %33, %cst_28 {dimension_numbers = #tpu.dot_dimension_numbers<[1], [0], [0], [1], [0, 0, 1, 1], [], []>} : vector<8x128xbf16>, vector<128x128xbf16>, vector<8x128xf32> -> vector<8x128xf32>
    %36 = vector.broadcast %34 : vector<1x128xf32> to vector<8x128xf32>
    %37 = arith.addf %35, %36 : vector<8x128xf32>
    %c0_29 = arith.constant 0 : index
    %c0_30 = arith.constant 0 : index
    %38 = vector.load %arg12[%c0_29, %c0_30] : memref<8x128xf32, #tpu.memory_space<vmem>>, vector<8x128xf32>
    tpu.vector_store %arg12[%c0_29, %c0_30], %37 {strides = array<i32>} : memref<8x128xf32, #tpu.memory_space<vmem>>, vector<8x128xf32>,
    return
  }
  func.func @transform_0(%arg0: i32) -> (i32, i32) {
    %c0_i32 = arith.constant 0 : i32
    %c0_i32_0 = arith.constant 0 : i32
    return %arg0, %c0_i32 : i32, i32
  }
  func.func @transform_1(%arg0: i32) -> (i32, i32) {
    %c0_i32 = arith.constant 0 : i32
    %c0_i32_0 = arith.constant 0 : i32
    %c0_i32_1 = arith.constant 0 : i32
    return %c0_i32, %c0_i32_0 : i32, i32
  }
  func.func @transform_2(%arg0: i32) -> (i32, i32) {
    %c0_i32 = arith.constant 0 : i32
    %c0_i32_0 = arith.constant 0 : i32
    %c0_i32_1 = arith.constant 0 : i32
    return %c0_i32, %c0_i32_0 : i32, i32
  }
  func.func @transform_3(%arg0: i32) -> (i32, i32) {
    %c0_i32 = arith.constant 0 : i32
    %c0_i32_0 = arith.constant 0 : i32
    %c0_i32_1 = arith.constant 0 : i32
    return %c0_i32, %c0_i32_0 : i32, i32
  }
  func.func @transform_4(%arg0: i32) -> (i32, i32) {
    %c0_i32 = arith.constant 0 : i32
    %c0_i32_0 = arith.constant 0 : i32
    %c0_i32_1 = arith.constant 0 : i32
    return %c0_i32, %c0_i32_0 : i32, i32
  }
  func.func @transform_5(%arg0: i32) -> (i32, i32) {
    %c0_i32 = arith.constant 0 : i32
    %c0_i32_0 = arith.constant 0 : i32
    %c0_i32_1 = arith.constant 0 : i32
    return %c0_i32, %c0_i32_0 : i32, i32
  }
  func.func @transform_6(%arg0: i32) -> (i32, i32) {
    %c0_i32 = arith.constant 0 : i32
    %c0_i32_0 = arith.constant 0 : i32
    %c0_i32_1 = arith.constant 0 : i32
    return %c0_i32, %c0_i32_0 : i32, i32
  }
  func.func @transform_7(%arg0: i32) -> (i32, i32) {
    %c0_i32 = arith.constant 0 : i32
    %c0_i32_0 = arith.constant 0 : i32
    %c0_i32_1 = arith.constant 0 : i32
    return %c0_i32, %c0_i32_0 : i32, i32
  }
  func.func @transform_8(%arg0: i32) -> (i32, i32) {
    %c0_i32 = arith.constant 0 : i32
    %c0_i32_0 = arith.constant 0 : i32
    %c0_i32_1 = arith.constant 0 : i32
    return %c0_i32, %c0_i32_0 : i32, i32
  }
  func.func @transform_9(%arg0: i32) -> (i32, i32) {
    %c0_i32 = arith.constant 0 : i32
    %c0_i32_0 = arith.constant 0 : i32
    %c0_i32_1 = arith.constant 0 : i32
    return %c0_i32, %c0_i32_0 : i32, i32
  }
  func.func @transform_10(%arg0: i32) -> (i32, i32) {
    %c0_i32 = arith.constant 0 : i32
    %c0_i32_0 = arith.constant 0 : i32
    %c0_i32_1 = arith.constant 0 : i32
    return %c0_i32, %c0_i32_0 : i32, i32
  }
  func.func @transform_11(%arg0: i32) -> (i32, i32) {
    %c0_i32 = arith.constant 0 : i32
    %c0_i32_0 = arith.constant 0 : i32
    return %arg0, %c0_i32 : i32, i32
  }
}

</mosaic_0001>

<llo_original>
// kernel: tpu_custom_call.1
$region0: #{tpu_custom_call.1}
  #allocation0 [shape = 'u32[]', space=smem, size = 0x4, offset = 0x4, fixed_abs, tag = 'smem constant byte address 0x4 - core index']
  #allocation1 [shape = 'u32[144,128]{1,0:T(1,128)}', space=vmem, size = 0x12000, scoped, tag = 'internal scratch']
  %s0 = inlined_call_operand.hbm [shape: bf16[8,128], index: 0, kind: input, shape index: {}]
  %s1 = inlined_call_operand.hbm [shape: bf16[128,256], index: 1, kind: input, shape index: {}]
  %s2 = inlined_call_operand.vmem [shape: f32[1,256], index: 2, kind: input, shape index: {}]
  %s3 = inlined_call_operand.hbm [shape: bf16[256,128], index: 3, kind: input, shape index: {}]
  %s4 = inlined_call_operand.vmem [shape: f32[1,128], index: 4, kind: input, shape index: {}]
  %s5 = inlined_call_operand.hbm [shape: bf16[128,128], index: 5, kind: input, shape index: {}]
  %s6 = inlined_call_operand.vmem [shape: f32[1,128], index: 6, kind: input, shape index: {}]
  %s7 = inlined_call_operand.hbm [shape: bf16[128,128], index: 7, kind: input, shape index: {}]
  %s8 = inlined_call_operand.vmem [shape: f32[1,128], index: 8, kind: input, shape index: {}]
  %s9 = inlined_call_operand.hbm [shape: bf16[128,128], index: 9, kind: input, shape index: {}]
  %s10 = inlined_call_operand.vmem [shape: f32[1,128], index: 10, kind: input, shape index: {}]
  %s11 = inlined_call_operand.hbm [shape: f32[8,128], index: 11, kind: output, shape index: {}]
  %s12 = sld [smem:[#allocation0]]
  $region78: #{tpu_custom_call.1} parent=0
    _
  %s14 = ssub.s32 1, %s12
  %s15 = scalar_select 0, %s14, %s12
  $region1: #{tpu_custom_call.1} parent=0
    #allocation2 [shape = 'u8[2048]{0}', space=vmem, size = 0x800, scoped, tag = 'input window, operand 0, single buffered']
    #allocation3 [shape = 's32[1]{0}', space=sflag, size = 0x4, scoped, tag = 'scoped memory for tpu_custom_call.1']
    #allocation4 [shape = 's32[1]{0}', space=sflag, size = 0x4, scoped, tag = 'scoped memory for tpu_custom_call.1']
    #allocation5 [shape = 'u8[65536]{0}', space=vmem, size = 0x10000, scoped, tag = 'input window, operand 1, single buffered']
    #allocation6 [shape = 's32[1]{0}', space=sflag, size = 0x4, scoped, tag = 'scoped memory for tpu_custom_call.1']
    #allocation7 [shape = 'u8[65536]{0}', space=vmem, size = 0x10000, scoped, tag = 'input window, operand 3, single buffered']
    #allocation8 [shape = 'u8[32768]{0}', space=vmem, size = 0x8000, scoped, tag = 'input window, operand 5, single buffered']
    #allocation9 [shape = 's32[1]{0}', space=sflag, size = 0x4, scoped, tag = 'scoped memory for tpu_custom_call.1']
    #allocation10 [shape = 'u8[32768]{0}', space=vmem, size = 0x8000, scoped, tag = 'input window, operand 7, single buffered']
    #allocation11 [shape = 'u8[32768]{0}', space=vmem, size = 0x8000, scoped, tag = 'input window, operand 9, single buffered']
    #allocation12 [shape = 's32[1]{0}', space=sflag, size = 0x4, scoped, tag = 'scoped memory for tpu_custom_call.1']
    #allocation13 [shape = 'u8[4096]{0}', space=vmem, size = 0x1000, scoped, tag = 'output window, operand 0, single buffered']
    %16 = vsyncpa [#allocation3], 0
    %17 = vsyncpa [#allocation6], 0
    %18 = vsyncpa [#allocation9], 0
    %19 = vsyncpa [#allocation12], 0
    %20 = vsyncpa [#allocation4], 0
    // Predicated region
    $region2: #{tpu_custom_call.1} parent=1 // pred_check
      _
    $region3: #{tpu_custom_call.1} parent=1 // pred_check_branch
      %22 = sbr.rel (0) target = $region5
    $region4: #{tpu_custom_call.1} parent=1 // pred_region
      %s24 = ssub.s32 64, 64
      %25 = vsyncadd [#allocation3], %s24
      %s27 = sshll.u32 [#allocation2], 4
      %s28 = int_to_ptr.vmem [resolvable:$true] %s27
      %30 = dma.hbm_to_vmem [thread:$0]  %s0, 64, %s28, [#allocation3]
    $region5: #{tpu_custom_call.1} parent=1 // pred_fallthru
      _
    // Predicated region
    $region6: #{tpu_custom_call.1} parent=1 // pred_check
      _
    $region7: #{tpu_custom_call.1} parent=1 // pred_check_branch
      %32 = sbr.rel (0) target = $region9
    $region8: #{tpu_custom_call.1} parent=1 // pred_region
      %s34 = ssub.s32 2048, 2048
      %35 = vsyncadd [#allocation6], %s34
      %s36 = sshll.u32 [#allocation5], 4
      %s37 = int_to_ptr.vmem [resolvable:$true] %s36
      %42 = dma.hbm_to_vmem [thread:$0]  %s1, 2048, %s37, [#allocation6], 128, 128, 8
    $region9: #{tpu_custom_call.1} parent=1 // pred_fallthru
      _
    // Predicated region
    $region10: #{tpu_custom_call.1} parent=1 // pred_check
      _
    $region11: #{tpu_custom_call.1} parent=1 // pred_check_branch
      %44 = sbr.rel (0) target = $region13
    $region12: #{tpu_custom_call.1} parent=1 // pred_region
      _
    $region13: #{tpu_custom_call.1} parent=1 // pred_fallthru
      _
    // Predicated region
    $region14: #{tpu_custom_call.1} parent=1 // pred_check
      _
    $region15: #{tpu_custom_call.1} parent=1 // pred_check_branch
      %46 = sbr.rel (0) target = $region17
    $region16: #{tpu_custom_call.1} parent=1 // pred_region
      %s48 = ssub.s32 2048, 2048
      %49 = vsyncadd [#allocation6], %s48
      %s50 = sshll.u32 [#allocation7], 4
      %s51 = int_to_ptr.vmem [resolvable:$true] %s50
      %56 = dma.hbm_to_vmem [thread:$0]  %s3, 2048, %s51, [#allocation6], 64, 64, 4
    $region17: #{tpu_custom_call.1} parent=1 // pred_fallthru
      _
    // Predicated region
    $region18: #{tpu_custom_call.1} parent=1 // pred_check
      _
    $region19: #{tpu_custom_call.1} parent=1 // pred_check_branch
      %58 = sbr.rel (0) target = $region21
    $region20: #{tpu_custom_call.1} parent=1 // pred_region
      _
    $region21: #{tpu_custom_call.1} parent=1 // pred_fallthru
      _
    // Predicated region
    $region22: #{tpu_custom_call.1} parent=1 // pred_check
      _
    $region23: #{tpu_custom_call.1} parent=1 // pred_check_branch
      %60 = sbr.rel (0) target = $region25
    $region24: #{tpu_custom_call.1} parent=1 // pred_region
      %s62 = ssub.s32 1024, 1024
      %63 = vsyncadd [#allocation9], %s62
      %s64 = sshll.u32 [#allocation8], 4
      %s65 = int_to_ptr.vmem [resolvable:$true] %s64
      %70 = dma.hbm_to_vmem [thread:$0]  %s5, 1024, %s65, [#allocation9], 64, 64, 4
    $region25: #{tpu_custom_call.1} parent=1 // pred_fallthru
      _
    // Predicated region
    $region26: #{tpu_custom_call.1} parent=1 // pred_check
      _
    $region27: #{tpu_custom_call.1} parent=1 // pred_check_branch
      %72 = sbr.rel (0) target = $region29
    $region28: #{tpu_custom_call.1} parent=1 // pred_region
      _
    $region29: #{tpu_custom_call.1} parent=1 // pred_fallthru
      _
    // Predicated region
    $region30: #{tpu_custom_call.1} parent=1 // pred_check
      _
    $region31: #{tpu_custom_call.1} parent=1 // pred_check_branch
      %74 = sbr.rel (0) target = $region33
    $region32: #{tpu_custom_call.1} parent=1 // pred_region
      %s76 = ssub.s32 1024, 1024
      %77 = vsyncadd [#allocation9], %s76
      %s78 = sshll.u32 [#allocation10], 4
      %s79 = int_to_ptr.vmem [resolvable:$true] %s78
      %84 = dma.hbm_to_vmem [thread:$0]  %s7, 1024, %s79, [#allocation9], 64, 64, 4
    $region33: #{tpu_custom_call.1} parent=1 // pred_fallthru
      _
    // Predicated region
    $region34: #{tpu_custom_call.1} parent=1 // pred_check
      _
    $region35: #{tpu_custom_call.1} parent=1 // pred_check_branch
      %86 = sbr.rel (0) target = $region37
    $region36: #{tpu_custom_call.1} parent=1 // pred_region
      _
    $region37: #{tpu_custom_call.1} parent=1 // pred_fallthru
      _
    // Predicated region
    $region38: #{tpu_custom_call.1} parent=1 // pred_check
      _
    $region39: #{tpu_custom_call.1} parent=1 // pred_check_branch
      %88 = sbr.rel (0) target = $region41
    $region40: #{tpu_custom_call.1} parent=1 // pred_region
      %s90 = ssub.s32 1024, 1024
      %91 = vsyncadd [#allocation12], %s90
      %s92 = sshll.u32 [#allocation11], 4
      %s93 = int_to_ptr.vmem [resolvable:$true] %s92
      %98 = dma.hbm_to_vmem [thread:$0]  %s9, 1024, %s93, [#allocation12], 64, 64, 4
    $region41: #{tpu_custom_call.1} parent=1 // pred_fallthru
      _
    // Predicated region
    $region42: #{tpu_custom_call.1} parent=1 // pred_check
      _
    $region43: #{tpu_custom_call.1} parent=1 // pred_check_branch
      %100 = sbr.rel (0) target = $region45
    $region44: #{tpu_custom_call.1} parent=1 // pred_region
      _
    $region45: #{tpu_custom_call.1} parent=1 // pred_fallthru
      _
    // Predicated region
    $region46: #{tpu_custom_call.1} parent=1 // pred_check
      _
    $region47: #{tpu_custom_call.1} parent=1 // pred_check_branch
      %102 = sbr.rel (0) target = $region49
    $region48: #{tpu_custom_call.1} parent=1 // pred_region
      %103 = dma.done [#allocation3], 64
    $region49: #{tpu_custom_call.1} parent=1 // pred_fallthru
      _
    // Predicated region
    $region50: #{tpu_custom_call.1} parent=1 // pred_check
      _
    $region51: #{tpu_custom_call.1} parent=1 // pred_check_branch
      %105 = sbr.rel (0) target = $region53
    $region52: #{tpu_custom_call.1} parent=1 // pred_region
      %106 = dma.done [#allocation6], 2048
    $region53: #{tpu_custom_call.1} parent=1 // pred_fallthru
      _
    // Predicated region
    $region54: #{tpu_custom_call.1} parent=1 // pred_check
      _
    $region55: #{tpu_custom_call.1} parent=1 // pred_check_branch
      %108 = sbr.rel (0) target = $region57
    $region56: #{tpu_custom_call.1} parent=1 // pred_region
      %109 = dma.done [#allocation6], 2048
    $region57: #{tpu_custom_call.1} parent=1 // pred_fallthru
      _
    // Predicated region
    $region58: #{tpu_custom_call.1} parent=1 // pred_check
      _
    $region59: #{tpu_custom_call.1} parent=1 // pred_check_branch
      %111 = sbr.rel (0) target = $region61
    $region60: #{tpu_custom_call.1} parent=1 // pred_region
      %112 = dma.done [#allocation9], 1024
    $region61: #{tpu_custom_call.1} parent=1 // pred_fallthru
      _
    // Predicated region
    $region62: #{tpu_custom_call.1} parent=1 // pred_check
      _
    $region63: #{tpu_custom_call.1} parent=1 // pred_check_branch
      %114 = sbr.rel (0) target = $region65
    $region64: #{tpu_custom_call.1} parent=1 // pred_region
      %115 = dma.done [#allocation9], 1024
    $region65: #{tpu_custom_call.1} parent=1 // pred_fallthru
      _
    // Predicated region
    $region66: #{tpu_custom_call.1} parent=1 // pred_check
      _
    $region67: #{tpu_custom_call.1} parent=1 // pred_check_branch
      %117 = sbr.rel (0) target = $region69
    $region68: #{tpu_custom_call.1} parent=1 // pred_region
      %118 = dma.done [#allocation12], 1024
    $region69: #{tpu_custom_call.1} parent=1 // pred_fallthru
      _
    %v120 = vld [vmem:[#allocation2] sm:$0xf]
    %v121 = vld [vmem:[#allocation5] sm:$0xff]
    %v122 = vld [vmem:[#allocation5 + $0x8] sm:$0xff]
    %v123 = vld [vmem:[#allocation5 + $0x10] sm:$0xff]
    %v124 = vld [vmem:[#allocation5 + $0x18] sm:$0xff]
    %v125 = vld [vmem:[#allocation5 + $0x20] sm:$0xff]
    %v126 = vld [vmem:[#allocation5 + $0x28] sm:$0xff]
    %v127 = vld [vmem:[#allocation5 + $0x30] sm:$0xff]
    %v128 = vld [vmem:[#allocation5 + $0x38] sm:$0xff]
    %v129 = vld [vmem:[#allocation5 + $0x40] sm:$0xff]
    %v130 = vld [vmem:[#allocation5 + $0x48] sm:$0xff]
    %v131 = vld [vmem:[#allocation5 + $0x50] sm:$0xff]
    %v132 = vld [vmem:[#allocation5 + $0x58] sm:$0xff]
    %v133 = vld [vmem:[#allocation5 + $0x60] sm:$0xff]
    %v134 = vld [vmem:[#allocation5 + $0x68] sm:$0xff]
    %v135 = vld [vmem:[#allocation5 + $0x70] sm:$0xff]
    %v136 = vld [vmem:[#allocation5 + $0x78] sm:$0xff]
    %v137 = vld [vmem:[%s2] sm:$0x3]
    %v139 = vlaneseq
    %v140 = vshrl.u32 %v139, 7
    %v141 = vsub.s32 0, %v140
    %v142 = vrot.slane %v137, %v141
    %v143 = vlaneseq
    %v144 = vshrl.u32 %v143, 7
    %v145 = vsub.s32 1, %v144
    %v146 = vrot.slane %v137, %v145
    %v165 = vunpack.c.l.b16 %v121
    %v166 = vunpack.c.h.b16 %v121
    %v167 = vunpack.c.l.b16 %v122
    %v168 = vunpack.c.h.b16 %v122
    %v169 = vunpack.c.l.b16 %v123
    %v170 = vunpack.c.h.b16 %v123
    %v171 = vunpack.c.l.b16 %v124
    %v172 = vunpack.c.h.b16 %v124
    %v173 = vunpack.c.l.b16 %v125
    %v174 = vunpack.c.h.b16 %v125
    %v175 = vunpack.c.l.b16 %v126
    %v176 = vunpack.c.h.b16 %v126
    %v177 = vunpack.c.l.b16 %v127
    %v178 = vunpack.c.h.b16 %v127
    %v179 = vunpack.c.l.b16 %v128
    %v180 = vunpack.c.h.b16 %v128
    %v181 = vunpack.c.l.b16 %v129
    %v182 = vunpack.c.h.b16 %v129
    %v183 = vunpack.c.l.b16 %v130
    %v184 = vunpack.c.h.b16 %v130
    %v185 = vunpack.c.l.b16 %v131
    %v186 = vunpack.c.h.b16 %v131
    %v187 = vunpack.c.l.b16 %v132
    %v188 = vunpack.c.h.b16 %v132
    %v189 = vunpack.c.l.b16 %v133
    %v190 = vunpack.c.h.b16 %v133
    %v191 = vunpack.c.l.b16 %v134
    %v192 = vunpack.c.h.b16 %v134
    %v193 = vunpack.c.l.b16 %v135
    %v194 = vunpack.c.h.b16 %v135
    %v195 = vunpack.c.l.b16 %v136
    %v196 = vunpack.c.h.b16 %v136
    %v197 = vpack.c.b16 %v167, %v165
    %v198 = vpack.c.b16 %v168, %v166
    %v199 = vpack.c.b16 %v171, %v169
    %v200 = vpack.c.b16 %v172, %v170
    %v201 = vpack.c.b16 %v175, %v173
    %v202 = vpack.c.b16 %v176, %v174
    %v203 = vpack.c.b16 %v179, %v177
    %v204 = vpack.c.b16 %v180, %v178
    %v205 = vpack.c.b16 %v183, %v181
    %v206 = vpack.c.b16 %v184, %v182
    %v207 = vpack.c.b16 %v187, %v185
    %v208 = vpack.c.b16 %v188, %v186
    %v209 = vpack.c.b16 %v191, %v189
    %v210 = vpack.c.b16 %v192, %v190
    %v211 = vpack.c.b16 %v195, %v193
    %v212 = vpack.c.b16 %v196, %v194
    %229 = vmatprep.subr.bf16.mxu0 %v198
    %230 = vmatpush1.bf16.msra.mxu0 %v197
    %231 = vmatprep.subr.bf16.mxu0 %v200
    %232 = vmatpush1.bf16.msra.mxu0 %v199
    %233 = vmatprep.subr.bf16.mxu0 %v202
    %234 = vmatpush1.bf16.msra.mxu0 %v201
    %235 = vmatprep.subr.bf16.mxu0 %v204
    %236 = vmatpush1.bf16.msra.mxu0 %v203
    %237 = vmatprep.subr.bf16.mxu0 %v206
    %238 = vmatpush1.bf16.msra.mxu0 %v205
    %239 = vmatprep.subr.bf16.mxu0 %v208
    %240 = vmatpush1.bf16.msra.mxu0 %v207
    %241 = vmatprep.subr.bf16.mxu0 %v210
    %242 = vmatpush1.bf16.msra.mxu0 %v209
    %243 = vmatprep.subr.bf16.mxu0 %v212
    %244 = vmatpush1.bf16.msra.mxu0 %v211
    %245 = vmatprep.subr.bf16.mxu0 0
    %246 = vmatpush1.bf16.msra.mxu0 0
    %247 = vmatprep.subr.bf16.mxu0 0
    %248 = vmatpush1.bf16.msra.mxu0 0
    %249 = vmatprep.subr.bf16.mxu0 0
    %250 = vmatpush1.bf16.msra.mxu0 0
    %251 = vmatprep.subr.bf16.mxu0 0
    %252 = vmatpush1.bf16.msra.mxu0 0
    %253 = vmatprep.subr.bf16.mxu0 0
    %254 = vmatpush1.bf16.msra.mxu0 0
    %255 = vmatprep.subr.bf16.mxu0 0
    %256 = vmatpush1.bf16.msra.mxu0 0
    %257 = vmatprep.subr.bf16.mxu0 0
    %258 = vmatpush1.bf16.msra.mxu0 0
    %259 = vmatprep.subr.bf16.mxu0 0
    %260 = vmatpush1.bf16.msra.mxu0 0
    %261 = vmatprep.mubr.bf16.mxu0 0
    %262 = vmatmul.mubr.bf16.gmra.mrb[0].mxu0 %v120
    %v263 = vpop.f32.mrb[0].mxu0
    %v264 = vadd.f32 %v142, %v263
    %v265 = vpop.f32.mrb[0].mxu0
    %v266 = vadd.f32 %v146, %v265
    %v267 = vpop.f32.mrb[0].mxu0
    %v268 = vpop.f32.mrb[0].mxu0
    %269 = vdwg.mxu0
    %v270 = vmax.f32 %v264, 0.0
    %v271 = vmax.f32 %v266, 0.0
    %v272 = vpack.c.bf16 %v270, %v270
    %v273 = vpack.c.bf16 %v271, %v271
    %v274 = vld [vmem:[#allocation7] sm:$0xf]
    %v275 = vld [vmem:[#allocation7 + $0x4] sm:$0xf]
    %v276 = vld [vmem:[#allocation7 + $0x8] sm:$0xf]
    %v277 = vld [vmem:[#allocation7 + $0xc] sm:$0xf]
    %v278 = vld [vmem:[#allocation7 + $0x10] sm:$0xf]
    %v279 = vld [vmem:[#allocation7 + $0x14] sm:$0xf]
    %v280 = vld [vmem:[#allocation7 + $0x18] sm:$0xf]
    %v281 = vld [vmem:[#allocation7 + $0x1c] sm:$0xf]
    %v282 = vld [vmem:[#allocation7 + $0x20] sm:$0xf]
    %v283 = vld [vmem:[#allocation7 + $0x24] sm:$0xf]
    %v284 = vld [vmem:[#allocation7 + $0x28] sm:$0xf]
    %v285 = vld [vmem:[#allocation7 + $0x2c] sm:$0xf]
    %v286 = vld [vmem:[#allocation7 + $0x30] sm:$0xf]
    %v287 = vld [vmem:[#allocation7 + $0x34] sm:$0xf]
    %v288 = vld [vmem:[#allocation7 + $0x38] sm:$0xf]
    %v289 = vld [vmem:[#allocation7 + $0x3c] sm:$0xf]
    %v290 = vld [vmem:[#allocation7 + $0x40] sm:$0xf]
    %v291 = vld [vmem:[#allocation7 + $0x44] sm:$0xf]
    %v292 = vld [vmem:[#allocation7 + $0x48] sm:$0xf]
    %v293 = vld [vmem:[#allocation7 + $0x4c] sm:$0xf]
    %v294 = vld [vmem:[#allocation7 + $0x50] sm:$0xf]
    %v295 = vld [vmem:[#allocation7 + $0x54] sm:$0xf]
    %v296 = vld [vmem:[#allocation7 + $0x58] sm:$0xf]
    %v297 = vld [vmem:[#allocation7 + $0x5c] sm:$0xf]
    %v298 = vld [vmem:[#allocation7 + $0x60] sm:$0xf]
    %v299 = vld [vmem:[#allocation7 + $0x64] sm:$0xf]
    %v300 = vld [vmem:[#allocation7 + $0x68] sm:$0xf]
    %v301 = vld [vmem:[#allocation7 + $0x6c] sm:$0xf]
    %v302 = vld [vmem:[#allocation7 + $0x70] sm:$0xf]
    %v303 = vld [vmem:[#allocation7 + $0x74] sm:$0xf]
    %v304 = vld [vmem:[#allocation7 + $0x78] sm:$0xf]
    %v305 = vld [vmem:[#allocation7 + $0x7c] sm:$0xf]
    %v306 = vld [vmem:[%s4] sm:$0x1]
    %v308 = vlaneseq
    %v309 = vshrl.u32 %v308, 7
    %v310 = vsub.s32 0, %v309
    %v311 = vrot.slane %v306, %v310
    %v345 = vunpack.c.l.b16 %v274
    %v346 = vunpack.c.l.b16 %v275
    %v347 = vunpack.c.l.b16 %v276
    %v348 = vunpack.c.l.b16 %v277
    %v349 = vunpack.c.l.b16 %v278
    %v350 = vunpack.c.l.b16 %v279
    %v351 = vunpack.c.l.b16 %v280
    %v352 = vunpack.c.l.b16 %v281
    %v353 = vunpack.c.l.b16 %v282
    %v354 = vunpack.c.l.b16 %v283
    %v355 = vunpack.c.l.b16 %v284
    %v356 = vunpack.c.l.b16 %v285
    %v357 = vunpack.c.l.b16 %v286
    %v358 = vunpack.c.l.b16 %v287
    %v359 = vunpack.c.l.b16 %v288
    %v360 = vunpack.c.l.b16 %v289
    %v361 = vunpack.c.l.b16 %v290
    %v362 = vunpack.c.l.b16 %v291
    %v363 = vunpack.c.l.b16 %v292
    %v364 = vunpack.c.l.b16 %v293
    %v365 = vunpack.c.l.b16 %v294
    %v366 = vunpack.c.l.b16 %v295
    %v367 = vunpack.c.l.b16 %v296
    %v368 = vunpack.c.l.b16 %v297
    %v369 = vunpack.c.l.b16 %v298
    %v370 = vunpack.c.l.b16 %v299
    %v371 = vunpack.c.l.b16 %v300
    %v372 = vunpack.c.l.b16 %v301
    %v373 = vunpack.c.l.b16 %v302
    %v374 = vunpack.c.l.b16 %v303
    %v375 = vunpack.c.l.b16 %v304
    %v376 = vunpack.c.l.b16 %v305
    %v377 = vpack.c.b16 %v346, %v345
    %v378 = vpack.c.b16 %v348, %v347
    %v379 = vpack.c.b16 %v350, %v349
    %v380 = vpack.c.b16 %v352, %v351
    %v381 = vpack.c.b16 %v354, %v353
    %v382 = vpack.c.b16 %v356, %v355
    %v383 = vpack.c.b16 %v358, %v357
    %v384 = vpack.c.b16 %v360, %v359
    %v385 = vpack.c.b16 %v362, %v361
    %v386 = vpack.c.b16 %v364, %v363
    %v387 = vpack.c.b16 %v366, %v365
    %v388 = vpack.c.b16 %v368, %v367
    %v389 = vpack.c.b16 %v370, %v369
    %v390 = vpack.c.b16 %v372, %v371
    %v391 = vpack.c.b16 %v374, %v373
    %v392 = vpack.c.b16 %v376, %v375
    %409 = vmatprep.subr.bf16.mxu0 0
    %410 = vmatpush1.bf16.msra.mxu0 %v377
    %411 = vmatprep.subr.bf16.mxu0 0
    %412 = vmatpush1.bf16.msra.mxu0 %v378
    %413 = vmatprep.subr.bf16.mxu0 0
    %414 = vmatpush1.bf16.msra.mxu0 %v379
    %415 = vmatprep.subr.bf16.mxu0 0
    %416 = vmatpush1.bf16.msra.mxu0 %v380
    %417 = vmatprep.subr.bf16.mxu0 0
    %418 = vmatpush1.bf16.msra.mxu0 %v381
    %419 = vmatprep.subr.bf16.mxu0 0
    %420 = vmatpush1.bf16.msra.mxu0 %v382
    %421 = vmatprep.subr.bf16.mxu0 0
    %422 = vmatpush1.bf16.msra.mxu0 %v383
    %423 = vmatprep.subr.bf16.mxu0 0
    %424 = vmatpush1.bf16.msra.mxu0 %v384
    %425 = vmatprep.subr.bf16.mxu0 0
    %426 = vmatpush1.bf16.msra.mxu0 %v385
    %427 = vmatprep.subr.bf16.mxu0 0
    %428 = vmatpush1.bf16.msra.mxu0 %v386
    %429 = vmatprep.subr.bf16.mxu0 0
    %430 = vmatpush1.bf16.msra.mxu0 %v387
    %431 = vmatprep.subr.bf16.mxu0 0
    %432 = vmatpush1.bf16.msra.mxu0 %v388
    %433 = vmatprep.subr.bf16.mxu0 0
    %434 = vmatpush1.bf16.msra.mxu0 %v389
    %435 = vmatprep.subr.bf16.mxu0 0
    %436 = vmatpush1.bf16.msra.mxu0 %v390
    %437 = vmatprep.subr.bf16.mxu0 0
    %438 = vmatpush1.bf16.msra.mxu0 %v391
    %439 = vmatprep.subr.bf16.mxu0 0
    %440 = vmatpush1.bf16.msra.mxu0 %v392
    %441 = vmatprep.mubr.bf16.mxu0 %v273
    %442 = vmatmul.mubr.bf16.gmra.mrb[0].mxu0 %v272
    %v443 = vpop.f32.mrb[0].mxu0
    %v444 = vadd.f32 %v311, %v443
    %v445 = vpop.f32.mrb[0].mxu0
    %v446 = vpop.f32.mrb[0].mxu0
    %v447 = vpop.f32.mrb[0].mxu0
    %448 = vdwg.mxu0
    %v449 = vmax.f32 %v444, 0.0
    %v450 = vpack.c.bf16 %v449, %v449
    %v451 = vld [vmem:[#allocation8] sm:$0xf]
    %v452 = vld [vmem:[#allocation8 + $0x4] sm:$0xf]
    %v453 = vld [vmem:[#allocation8 + $0x8] sm:$0xf]
    %v454 = vld [vmem:[#allocation8 + $0xc] sm:$0xf]
    %v455 = vld [vmem:[#allocation8 + $0x10] sm:$0xf]
    %v456 = vld [vmem:[#allocation8 + $0x14] sm:$0xf]
    %v457 = vld [vmem:[#allocation8 + $0x18] sm:$0xf]
    %v458 = vld [vmem:[#allocation8 + $0x1c] sm:$0xf]
    %v459 = vld [vmem:[#allocation8 + $0x20] sm:$0xf]
    %v460 = vld [vmem:[#allocation8 + $0x24] sm:$0xf]
    %v461 = vld [vmem:[#allocation8 + $0x28] sm:$0xf]
    %v462 = vld [vmem:[#allocation8 + $0x2c] sm:$0xf]
    %v463 = vld [vmem:[#allocation8 + $0x30] sm:$0xf]
    %v464 = vld [vmem:[#allocation8 + $0x34] sm:$0xf]
    %v465 = vld [vmem:[#allocation8 + $0x38] sm:$0xf]
    %v466 = vld [vmem:[#allocation8 + $0x3c] sm:$0xf]
    %v467 = vld [vmem:[%s6] sm:$0x1]
    %v469 = vlaneseq
    %v470 = vshrl.u32 %v469, 7
    %v471 = vsub.s32 0, %v470
    %v472 = vrot.slane %v467, %v471
    %v490 = vunpack.c.l.b16 %v451
    %v491 = vunpack.c.l.b16 %v452
    %v492 = vunpack.c.l.b16 %v453
    %v493 = vunpack.c.l.b16 %v454
    %v494 = vunpack.c.l.b16 %v455
    %v495 = vunpack.c.l.b16 %v456
    %v496 = vunpack.c.l.b16 %v457
    %v497 = vunpack.c.l.b16 %v458
    %v498 = vunpack.c.l.b16 %v459
    %v499 = vunpack.c.l.b16 %v460
    %v500 = vunpack.c.l.b16 %v461
    %v501 = vunpack.c.l.b16 %v462
    %v502 = vunpack.c.l.b16 %v463
    %v503 = vunpack.c.l.b16 %v464
    %v504 = vunpack.c.l.b16 %v465
    %v505 = vunpack.c.l.b16 %v466
    %v506 = vpack.c.b16 %v491, %v490
    %v507 = vpack.c.b16 %v493, %v492
    %v508 = vpack.c.b16 %v495, %v494
    %v509 = vpack.c.b16 %v497, %v496
    %v510 = vpack.c.b16 %v499, %v498
    %v511 = vpack.c.b16 %v501, %v500
    %v512 = vpack.c.b16 %v503, %v502
    %v513 = vpack.c.b16 %v505, %v504
    %522 = vmatprep.subr.bf16.mxu0 0
    %523 = vmatpush1.bf16.msra.mxu0 %v506
    %524 = vmatprep.subr.bf16.mxu0 0
    %525 = vmatpush1.bf16.msra.mxu0 %v507
    %526 = vmatprep.subr.bf16.mxu0 0
    %527 = vmatpush1.bf16.msra.mxu0 %v508
    %528 = vmatprep.subr.bf16.mxu0 0
    %529 = vmatpush1.bf16.msra.mxu0 %v509
    %530 = vmatprep.subr.bf16.mxu0 0
    %531 = vmatpush1.bf16.msra.mxu0 %v510
    %532 = vmatprep.subr.bf16.mxu0 0
    %533 = vmatpush1.bf16.msra.mxu0 %v511
    %534 = vmatprep.subr.bf16.mxu0 0
    %535 = vmatpush1.bf16.msra.mxu0 %v512
    %536 = vmatprep.subr.bf16.mxu0 0
    %537 = vmatpush1.bf16.msra.mxu0 %v513
    %538 = vmatprep.subr.bf16.mxu0 0
    %539 = vmatpush1.bf16.msra.mxu0 0
    %540 = vmatprep.subr.bf16.mxu0 0
    %541 = vmatpush1.bf16.msra.mxu0 0
    %542 = vmatprep.subr.bf16.mxu0 0
    %543 = vmatpush1.bf16.msra.mxu0 0
    %544 = vmatprep.subr.bf16.mxu0 0
    %545 = vmatpush1.bf16.msra.mxu0 0
    %546 = vmatprep.subr.bf16.mxu0 0
    %547 = vmatpush1.bf16.msra.mxu0 0
    %548 = vmatprep.subr.bf16.mxu0 0
    %549 = vmatpush1.bf16.msra.mxu0 0
    %550 = vmatprep.subr.bf16.mxu0 0
    %551 = vmatpush1.bf16.msra.mxu0 0
    %552 = vmatprep.subr.bf16.mxu0 0
    %553 = vmatpush1.bf16.msra.mxu0 0
    %554 = vmatprep.mubr.bf16.mxu0 0
    %555 = vmatmul.mubr.bf16.gmra.mrb[0].mxu0 %v450
    %v556 = vpop.f32.mrb[0].mxu0
    %v557 = vadd.f32 %v472, %v556
    %v558 = vpop.f32.mrb[0].mxu0
    %v559 = vpop.f32.mrb[0].mxu0
    %v560 = vpop.f32.mrb[0].mxu0
    %561 = vdwg.mxu0
    %v562 = vmax.f32 %v557, 0.0
    %v563 = vpack.c.bf16 %v562, %v562
    %v564 = vld [vmem:[#allocation10] sm:$0xf]
    %v565 = vld [vmem:[#allocation10 + $0x4] sm:$0xf]
    %v566 = vld [vmem:[#allocation10 + $0x8] sm:$0xf]
    %v567 = vld [vmem:[#allocation10 + $0xc] sm:$0xf]
    %v568 = vld [vmem:[#allocation10 + $0x10] sm:$0xf]
    %v569 = vld [vmem:[#allocation10 + $0x14] sm:$0xf]
    %v570 = vld [vmem:[#allocation10 + $0x18] sm:$0xf]
    %v571 = vld [vmem:[#allocation10 + $0x1c] sm:$0xf]
    %v572 = vld [vmem:[#allocation10 + $0x20] sm:$0xf]
    %v573 = vld [vmem:[#allocation10 + $0x24] sm:$0xf]
    %v574 = vld [vmem:[#allocation10 + $0x28] sm:$0xf]
    %v575 = vld [vmem:[#allocation10 + $0x2c] sm:$0xf]
    %v576 = vld [vmem:[#allocation10 + $0x30] sm:$0xf]
    %v577 = vld [vmem:[#allocation10 + $0x34] sm:$0xf]
    %v578 = vld [vmem:[#allocation10 + $0x38] sm:$0xf]
    %v579 = vld [vmem:[#allocation10 + $0x3c] sm:$0xf]
    %v580 = vld [vmem:[%s8] sm:$0x1]
    %v582 = vlaneseq
    %v583 = vshrl.u32 %v582, 7
    %v584 = vsub.s32 0, %v583
    %v585 = vrot.slane %v580, %v584
    %v603 = vunpack.c.l.b16 %v564
    %v604 = vunpack.c.l.b16 %v565
    %v605 = vunpack.c.l.b16 %v566
    %v606 = vunpack.c.l.b16 %v567
    %v607 = vunpack.c.l.b16 %v568
    %v608 = vunpack.c.l.b16 %v569
    %v609 = vunpack.c.l.b16 %v570
    %v610 = vunpack.c.l.b16 %v571
    %v611 = vunpack.c.l.b16 %v572
    %v612 = vunpack.c.l.b16 %v573
    %v613 = vunpack.c.l.b16 %v574
    %v614 = vunpack.c.l.b16 %v575
    %v615 = vunpack.c.l.b16 %v576
    %v616 = vunpack.c.l.b16 %v577
    %v617 = vunpack.c.l.b16 %v578
    %v618 = vunpack.c.l.b16 %v579
    %v619 = vpack.c.b16 %v604, %v603
    %v620 = vpack.c.b16 %v606, %v605
    %v621 = vpack.c.b16 %v608, %v607
    %v622 = vpack.c.b16 %v610, %v609
    %v623 = vpack.c.b16 %v612, %v611
    %v624 = vpack.c.b16 %v614, %v613
    %v625 = vpack.c.b16 %v616, %v615
    %v626 = vpack.c.b16 %v618, %v617
    %635 = vmatprep.subr.bf16.mxu0 0
    %636 = vmatpush1.bf16.msra.mxu0 %v619
    %637 = vmatprep.subr.bf16.mxu0 0
    %638 = vmatpush1.bf16.msra.mxu0 %v620
    %639 = vmatprep.subr.bf16.mxu0 0
    %640 = vmatpush1.bf16.msra.mxu0 %v621
    %641 = vmatprep.subr.bf16.mxu0 0
    %642 = vmatpush1.bf16.msra.mxu0 %v622
    %643 = vmatprep.subr.bf16.mxu0 0
    %644 = vmatpush1.bf16.msra.mxu0 %v623
    %645 = vmatprep.subr.bf16.mxu0 0
    %646 = vmatpush1.bf16.msra.mxu0 %v624
    %647 = vmatprep.subr.bf16.mxu0 0
    %648 = vmatpush1.bf16.msra.mxu0 %v625
    %649 = vmatprep.subr.bf16.mxu0 0
    %650 = vmatpush1.bf16.msra.mxu0 %v626
    %651 = vmatprep.subr.bf16.mxu0 0
    %652 = vmatpush1.bf16.msra.mxu0 0
    %653 = vmatprep.subr.bf16.mxu0 0
    %654 = vmatpush1.bf16.msra.mxu0 0
    %655 = vmatprep.subr.bf16.mxu0 0
    %656 = vmatpush1.bf16.msra.mxu0 0
    %657 = vmatprep.subr.bf16.mxu0 0
    %658 = vmatpush1.bf16.msra.mxu0 0
    %659 = vmatprep.subr.bf16.mxu0 0
    %660 = vmatpush1.bf16.msra.mxu0 0
    %661 = vmatprep.subr.bf16.mxu0 0
    %662 = vmatpush1.bf16.msra.mxu0 0
    %663 = vmatprep.subr.bf16.mxu0 0
    %664 = vmatpush1.bf16.msra.mxu0 0
    %665 = vmatprep.subr.bf16.mxu0 0
    %666 = vmatpush1.bf16.msra.mxu0 0
    %667 = vmatprep.mubr.bf16.mxu0 0
    %668 = vmatmul.mubr.bf16.gmra.mrb[0].mxu0 %v563
    %v669 = vpop.f32.mrb[0].mxu0
    %v670 = vadd.f32 %v585, %v669
    %v671 = vpop.f32.mrb[0].mxu0
    %v672 = vpop.f32.mrb[0].mxu0
    %v673 = vpop.f32.mrb[0].mxu0
    %674 = vdwg.mxu0
    %v675 = vmax.f32 %v670, 0.0
    %v676 = vpack.c.bf16 %v675, %v675
    %v677 = vld [vmem:[#allocation11] sm:$0xf]
    %v678 = vld [vmem:[#allocation11 + $0x4] sm:$0xf]
    %v679 = vld [vmem:[#allocation11 + $0x8] sm:$0xf]
    %v680 = vld [vmem:[#allocation11 + $0xc] sm:$0xf]
    %v681 = vld [vmem:[#allocation11 + $0x10] sm:$0xf]
    %v682 = vld [vmem:[#allocation11 + $0x14] sm:$0xf]
    %v683 = vld [vmem:[#allocation11 + $0x18] sm:$0xf]
    %v684 = vld [vmem:[#allocation11 + $0x1c] sm:$0xf]
    %v685 = vld [vmem:[#allocation11 + $0x20] sm:$0xf]
    %v686 = vld [vmem:[#allocation11 + $0x24] sm:$0xf]
    %v687 = vld [vmem:[#allocation11 + $0x28] sm:$0xf]
    %v688 = vld [vmem:[#allocation11 + $0x2c] sm:$0xf]
    %v689 = vld [vmem:[#allocation11 + $0x30] sm:$0xf]
    %v690 = vld [vmem:[#allocation11 + $0x34] sm:$0xf]
    %v691 = vld [vmem:[#allocation11 + $0x38] sm:$0xf]
    %v692 = vld [vmem:[#allocation11 + $0x3c] sm:$0xf]
    %v693 = vld [vmem:[%s10] sm:$0x1]
    %v695 = vlaneseq
    %v696 = vshrl.u32 %v695, 7
    %v697 = vsub.s32 0, %v696
    %v698 = vrot.slane %v693, %v697
    %v716 = vunpack.c.l.b16 %v677
    %v717 = vunpack.c.l.b16 %v678
    %v718 = vunpack.c.l.b16 %v679
    %v719 = vunpack.c.l.b16 %v680
    %v720 = vunpack.c.l.b16 %v681
    %v721 = vunpack.c.l.b16 %v682
    %v722 = vunpack.c.l.b16 %v683
    %v723 = vunpack.c.l.b16 %v684
    %v724 = vunpack.c.l.b16 %v685
    %v725 = vunpack.c.l.b16 %v686
    %v726 = vunpack.c.l.b16 %v687
    %v727 = vunpack.c.l.b16 %v688
    %v728 = vunpack.c.l.b16 %v689
    %v729 = vunpack.c.l.b16 %v690
    %v730 = vunpack.c.l.b16 %v691
    %v731 = vunpack.c.l.b16 %v692
    %v732 = vpack.c.b16 %v717, %v716
    %v733 = vpack.c.b16 %v719, %v718
    %v734 = vpack.c.b16 %v721, %v720
    %v735 = vpack.c.b16 %v723, %v722
    %v736 = vpack.c.b16 %v725, %v724
    %v737 = vpack.c.b16 %v727, %v726
    %v738 = vpack.c.b16 %v729, %v728
    %v739 = vpack.c.b16 %v731, %v730
    %748 = vmatprep.subr.bf16.mxu0 0
    %749 = vmatpush1.bf16.msra.mxu0 %v732
    %750 = vmatprep.subr.bf16.mxu0 0
    %751 = vmatpush1.bf16.msra.mxu0 %v733
    %752 = vmatprep.subr.bf16.mxu0 0
    %753 = vmatpush1.bf16.msra.mxu0 %v734
    %754 = vmatprep.subr.bf16.mxu0 0
    %755 = vmatpush1.bf16.msra.mxu0 %v735
    %756 = vmatprep.subr.bf16.mxu0 0
    %757 = vmatpush1.bf16.msra.mxu0 %v736
    %758 = vmatprep.subr.bf16.mxu0 0
    %759 = vmatpush1.bf16.msra.mxu0 %v737
    %760 = vmatprep.subr.bf16.mxu0 0
    %761 = vmatpush1.bf16.msra.mxu0 %v738
    %762 = vmatprep.subr.bf16.mxu0 0
    %763 = vmatpush1.bf16.msra.mxu0 %v739
    %764 = vmatprep.subr.bf16.mxu0 0
    %765 = vmatpush1.bf16.msra.mxu0 0
    %766 = vmatprep.subr.bf16.mxu0 0
    %767 = vmatpush1.bf16.msra.mxu0 0
    %768 = vmatprep.subr.bf16.mxu0 0
    %769 = vmatpush1.bf16.msra.mxu0 0
    %770 = vmatprep.subr.bf16.mxu0 0
    %771 = vmatpush1.bf16.msra.mxu0 0
    %772 = vmatprep.subr.bf16.mxu0 0
    %773 = vmatpush1.bf16.msra.mxu0 0
    %774 = vmatprep.subr.bf16.mxu0 0
    %775 = vmatpush1.bf16.msra.mxu0 0
    %776 = vmatprep.subr.bf16.mxu0 0
    %777 = vmatpush1.bf16.msra.mxu0 0
    %778 = vmatprep.subr.bf16.mxu0 0
    %779 = vmatpush1.bf16.msra.mxu0 0
    %780 = vmatprep.mubr.bf16.mxu0 0
    %781 = vmatmul.mubr.bf16.gmra.mrb[0].mxu0 %v676
    %v782 = vpop.f32.mrb[0].mxu0
    %v783 = vadd.f32 %v698, %v782
    %v784 = vpop.f32.mrb[0].mxu0
    %v785 = vpop.f32.mrb[0].mxu0
    %v786 = vpop.f32.mrb[0].mxu0
    %787 = vdwg.mxu0
    %788 = vst [vmem:[#allocation13] sm:$0xff] %v783
    // Predicated region
    $region70: #{tpu_custom_call.1} parent=1 // pred_check
      _
    $region71: #{tpu_custom_call.1} parent=1 // pred_check_branch
      %790 = sbr.rel (0) target = $region73
    $region72: #{tpu_custom_call.1} parent=1 // pred_region
      %s792 = ssub.s32 128, 128
      %793 = vsyncadd [#allocation4], %s792
      %s795 = sshll.u32 [#allocation13], 4
      %s796 = int_to_ptr.vmem [resolvable:$true] %s795
      %798 = dma.vmem_to_hbm [thread:$0]  %s796, 128, %s11, [#allocation4]
    $region73: #{tpu_custom_call.1} parent=1 // pred_fallthru
      _
    // Predicated region
    $region74: #{tpu_custom_call.1} parent=1 // pred_check
      _
    $region75: #{tpu_custom_call.1} parent=1 // pred_check_branch
      %800 = sbr.rel (0) target = $region77
    $region76: #{tpu_custom_call.1} parent=1 // pred_region
      %801 = dma.done [#allocation4], 128
    $region77: #{tpu_custom_call.1} parent=1 // pred_fallthru
      _
    %802 = vsyncpa [#allocation3], 1
    %803 = vsyncpa [#allocation6], 1
    %804 = vsyncpa [#allocation9], 1
    %805 = vsyncpa [#allocation12], 1
    %806 = vsyncpa [#allocation4], 1

</llo_original>
